<compile_context>
chip_gen: v7x
topology: tpu7x:2x2x1
jax: 0.10.0
libtpu: 0.0.40
codegen_flags: <defaults>
</compile_context>

<pallas_src>
import functools

import jax
import jax.numpy as jnp
from jax import lax
from jax.experimental import pallas as pl
from jax.experimental.pallas import tpu as pltpu


def _round_up(a, b):
    return (a + b - 1) // b * b


def _make_kernel(num_factors, out_rank_cols, add_bias, cast_x_bf16):
    OR = out_rank_cols  # O * R

    def kernel(*refs):
        if add_bias:
            x_ref, wm_ref, wb_ref, st_ref, o_ref = refs
        else:
            x_ref, wm_ref, st_ref, o_ref = refs

        x = x_ref[...]                                   # (tile_n, F)
        if cast_x_bf16:
            # Cast the already-loaded f32 tile (no extra HBM traffic).
            x = x.astype(jnp.bfloat16)
        w = wm_ref[...]                                  # (P*O*R, F)

        # Fused factor matmul on the MXU: contract F of both operands
        # ('kf,nf->kn'), i.e. W @ X_tile^T -> lane-dense (P*O*R, tile_n).
        t = lax.dot_general(
            w, x,
            dimension_numbers=(((1,), (1,)), ((), ())),
            preferred_element_type=jnp.float32)

        if add_bias:
            # Bias column of X == 1  =>  add each factor's bias row, broadcast
            # over lanes.  Compiled out entirely when the module has bias=False.
            t = t + wb_ref[...]                          # (P*O*R,1)+(P*O*R,tile_n)

        # Elementwise product over polynomial orders; the P chunks are
        # sublane-aligned static slices of t (O*R is a multiple of 8 for the
        # module's default shapes).
        prod = t[0:OR, :]
        for p in range(1, num_factors):
            prod = prod * t[p * OR:(p + 1) * OR, :]

        # Sum over rank r via the (O, O*R) reduction matrix on the MXU.
        # Output tile (O, tile_n) is lane-dense -> unmasked stores.
        o_ref[...] = jnp.dot(st_ref[...], prod,
                             preferred_element_type=jnp.float32).astype(o_ref.dtype)

    return kernel


def _pick_tile_n(n, user_tile_n):
    """Generation-aware tile size along the sample (lane) axis."""
    kind = jax.devices()[0].device_kind.lower()
    if "v6" in kind:
        cap = 16384          # 128 MiB VMEM: big tiles amortize per-step overhead
    elif "v7" in kind:
        cap = 8192           # 64 MiB physical VMEM: keep per-step footprint modest
    else:
        cap = 8192           # v5e / unknown: safe together with the explicit VMEM limit
    if user_tile_n is not None:
        cap = min(cap, max(128, _round_up(user_tile_n, 128)))
    # Target >= 2 grid steps when N allows (lets the 1-D "parallel" axis shard
    # across both TensorCores on v7x); never below one 128-lane tile.
    half = _round_up(max((n + 1) // 2, 1), 128)
    return max(128, min(cap, half))


def mpr_lowrank_cp_forward(x, factors, *, bias=True, tile_n=None,
                           use_bf16_matmul=False, lane_major_output=False):
    """x: (N, F); factors: (P, O, Fb, R), Fb = F + bias (PyTorch layout).

    Returns (N, O) float32 (PyTorch semantics).  With lane_major_output=True
    returns the kernel-native lane-dense (O, N) and skips the final XLA
    transpose (which is otherwise an extra full read+write of the output).
    """
    P, O, Fb, R = factors.shape
    N, F = x.shape
    assert Fb == F + int(bias)

    # (P, O, Fb, R) -> (P, O, R, Fb) -> (P*O*R, Fb); row k = p*O*R + o*R + r.
    w_all = jnp.transpose(factors, (0, 1, 3, 2)).reshape(P * O * R, Fb)
    w_all = w_all.astype(jnp.float32)
    w_main = w_all[:, :F]                                 # (P*O*R, F)
    w_bias = w_all[:, F:Fb] if bias else None             # (P*O*R, 1), stays f32
    # Rank-reduction matrix S^T: (O, O*R), S^T[o, o*R + r] = 1.
    s_t = jnp.kron(jnp.eye(O, dtype=jnp.float32),
                   jnp.ones((1, R), dtype=jnp.float32))

    # bf16 MXU path: never cast X in the wrapper (extra HBM pass over X);
    # cast the loaded tile in-kernel, or use producer-supplied bf16 X as-is.
    compute_bf16 = use_bf16_matmul or x.dtype == jnp.bfloat16
    cast_x_in_kernel = compute_bf16 and x.dtype != jnp.bfloat16
    if compute_bf16:
        w_main = w_main.astype(jnp.bfloat16)

    tile = _pick_tile_n(N, tile_n)

    if N <= tile:
        # Single step: exact full-array blocks (always legal, no edge padding).
        tile = N
        grid = (1,)
        x_block = (N, F)
        out_block = (O, N)
    else:
        # Ragged tail handled by Pallas edge masking -> no jnp.pad copy of X.
        grid = (pl.cdiv(N, tile),)
        x_block = (tile, F)
        out_block = (O, tile)

    # VMEM budget per grid step: double-buffered X tile (lane-padded F->128,
    # ~1 KB/lane) + f32 intermediates t/prod (~0.5 KB/lane) + double-buffered
    # output (~64 B/lane) + temporaries; ~2.5 KB per lane of tile_n + margin.
    vmem_limit = int(max(32 * 1024 * 1024, tile * 2560 + (8 << 20)))

    in_specs = [
        # X streamed in tile-row blocks along the grid (lane axis = samples
        # inside the kernel after the fused transposed matmul).
        pl.BlockSpec(x_block, lambda i: (i, 0)),
        # Weights / bias / S^T span the full (tiny) arrays with constant index
        # maps -> fetched once, resident across the grid.  (pl.Buffered(1)
        # would drop their duplicate pipeline buffers; skipped here since they
        # total only a few KB at these shapes and single-buffering support for
        # top-level BlockSpecs is version-sensitive.)
        pl.BlockSpec((P * O * R, F), lambda i: (0, 0)),
    ]
    operands = [x, w_main]
    if bias:
        in_specs.append(pl.BlockSpec((P * O * R, 1), lambda i: (0, 0)))
        operands.append(w_bias)
    in_specs.append(pl.BlockSpec((O, O * R), lambda i: (0, 0)))
    operands.append(s_t)

    out_t = pl.pallas_call(
        _make_kernel(P, O * R, bias, cast_x_in_kernel),
        out_shape=jax.ShapeDtypeStruct((O, N), jnp.float32),
        grid_spec=pltpu.PrefetchScalarGridSpec(
            num_scalar_prefetch=0,
            grid=grid,
            in_specs=in_specs,
            out_specs=pl.BlockSpec(out_block, lambda i: (0, i)),
        ),
        compiler_params=pltpu.CompilerParams(
            # 1-D sample axis is independent -> shardable across the two
            # TensorCores on v7x (grid is kept >= 2 steps when N allows).
            dimension_semantics=("parallel",),
            vmem_limit_bytes=vmem_limit),
    )(*operands)

    if lane_major_output:
        return out_t            # (O, N) lane-dense; no extra HBM pass
    return out_t.T              # (N, O) to match the PyTorch module


def mpr_lowrank_cp_reference(x, factors, *, bias=True):
    """Pure-JAX reference matching the PyTorch forward exactly."""
    N = x.shape[0]
    if bias:
        x = jnp.concatenate([x, jnp.ones((N, 1), dtype=x.dtype)], axis=1)
    thingies = [jnp.einsum('nf,ofr->nor', x, f) for f in factors]
    return functools.reduce(lambda a, b: a * b, thingies).sum(axis=2)


if __name__ == "__main__":
    # Small shapes consistent with the module.
    num_inputs = 16
    num_outputs = 8
    polynom_order = 3
    rank = 4
    bias = True
    N = 16

    Fb = num_inputs + int(bias)

    key = jax.random.PRNGKey(0)
    kx, kw, kx2 = jax.random.split(key, 3)
    x = jax.random.normal(kx, (N, num_inputs), dtype=jnp.float32)
    # Deterministic "randn" init of the P stacked factors: (P, O, Fb, R)
    factors = jax.random.normal(
        kw, (polynom_order, num_outputs, Fb, rank), dtype=jnp.float32)

    out = mpr_lowrank_cp_forward(x, factors, bias=bias)
    out = jax.block_until_ready(out)
    ref = mpr_lowrank_cp_reference(x, factors, bias=bias)
    assert out.shape == (N, num_outputs)
    assert jnp.allclose(out, ref, atol=1e-3, rtol=1e-3), "mismatch vs reference (N=16)"

    # Ragged batch: exercises multi-step grid + masked partial last tile
    # (no wrapper-side jnp.pad of X).
    N2 = 300
    x2 = jax.random.normal(kx2, (N2, num_inputs), dtype=jnp.float32)
    out2 = jax.block_until_ready(mpr_lowrank_cp_forward(x2, factors, bias=bias))
    ref2 = mpr_lowrank_cp_reference(x2, factors, bias=bias)
    assert out2.shape == (N2, num_outputs)
    assert jnp.allclose(out2, ref2, atol=1e-3, rtol=1e-3), "mismatch vs reference (N=300)"

    print("KERNEL_OK")
</pallas_src>

<mosaic_0001>
module attributes {stable_mosaic.version = 11 : i64} {
  func.func @kernel(%arg0: i32, %arg1: memref<16x16xf32, #tpu.memory_space<vmem>>, %arg2: memref<96x16xf32, #tpu.memory_space<vmem>>, %arg3: memref<96x1xf32, #tpu.memory_space<vmem>>, %arg4: memref<8x32xf32, #tpu.memory_space<vmem>>, %arg5: memref<8x16xf32, #tpu.memory_space<vmem>>) attributes {dimension_semantics = [#tpu.dimension_semantics<parallel>], iteration_bounds = array<i64: 1>, scalar_prefetch = 0 : i64, scratch_operands = 0 : i64, tpu.core_type = #tpu.core_type<tc>, window_params = [{transform_indices = @transform_0, window_bounds = array<i64: 16, 16>}, {pipeline_mode = #tpu.pipeline_mode<synchronous>, transform_indices = @transform_1, window_bounds = array<i64: 96, 16>}, {pipeline_mode = #tpu.pipeline_mode<synchronous>, transform_indices = @transform_2, window_bounds = array<i64: 96, 1>}, {pipeline_mode = #tpu.pipeline_mode<synchronous>, transform_indices = @transform_3, window_bounds = array<i64: 8, 32>}, {transform_indices = @transform_4, window_bounds = array<i64: 8, 16>}]} {
    %c0 = arith.constant 0 : index
    %c0_0 = arith.constant 0 : index
    %0 = vector.load %arg1[%c0, %c0_0] : memref<16x16xf32, #tpu.memory_space<vmem>>, vector<16x16xf32>
    %c0_1 = arith.constant 0 : index
    %c0_2 = arith.constant 0 : index
    %1 = vector.load %arg2[%c0_1, %c0_2] : memref<96x16xf32, #tpu.memory_space<vmem>>, vector<96x16xf32>
    %cst = arith.constant dense<0.000000e+00> : vector<96x16xf32>
    %2 = tpu.matmul %1, %0, %cst {dimension_numbers = #tpu.dot_dimension_numbers<[1], [1], [0], [0], [0, 0, 1, 0], [], []>} : vector<96x16xf32>, vector<16x16xf32>, vector<96x16xf32> -> vector<96x16xf32>
    %c0_3 = arith.constant 0 : index
    %c0_4 = arith.constant 0 : index
    %3 = vector.load %arg3[%c0_3, %c0_4] : memref<96x1xf32, #tpu.memory_space<vmem>>, vector<96x1xf32>
    %4 = vector.broadcast %3 : vector<96x1xf32> to vector<96x16xf32>
    %5 = arith.addf %2, %4 : vector<96x16xf32>
    %6 = vector.extract_strided_slice %5 {offsets = [0, 0], sizes = [32, 16], strides = [1, 1]} : vector<96x16xf32> to vector<32x16xf32>
    %7 = vector.extract_strided_slice %5 {offsets = [32, 0], sizes = [32, 16], strides = [1, 1]} : vector<96x16xf32> to vector<32x16xf32>
    %8 = arith.mulf %6, %7 : vector<32x16xf32>
    %9 = vector.extract_strided_slice %5 {offsets = [64, 0], sizes = [32, 16], strides = [1, 1]} : vector<96x16xf32> to vector<32x16xf32>
    %10 = arith.mulf %8, %9 : vector<32x16xf32>
    %c0_5 = arith.constant 0 : index
    %c0_6 = arith.constant 0 : index
    %11 = vector.load %arg4[%c0_5, %c0_6] : memref<8x32xf32, #tpu.memory_space<vmem>>, vector<8x32xf32>
    %cst_7 = arith.constant dense<0.000000e+00> : vector<8x16xf32>
    %12 = tpu.matmul %11, %10, %cst_7 {dimension_numbers = #tpu.dot_dimension_numbers<[1], [0], [0], [1], [0, 0, 1, 1], [], []>} : vector<8x32xf32>, vector<32x16xf32>, vector<8x16xf32> -> vector<8x16xf32>
    %c0_8 = arith.constant 0 : index
    %c0_9 = arith.constant 0 : index
    %13 = vector.load %arg5[%c0_8, %c0_9] : memref<8x16xf32, #tpu.memory_space<vmem>>, vector<8x16xf32>
    tpu.vector_store %arg5[%c0_8, %c0_9], %12 {strides = array<i32>} : memref<8x16xf32, #tpu.memory_space<vmem>>, vector<8x16xf32>,
    return
  }
  func.func @transform_0(%arg0: i32) -> (i32, i32) {
    %c0_i32 = arith.constant 0 : i32
    %c0_i32_0 = arith.constant 0 : i32
    return %arg0, %c0_i32 : i32, i32
  }
  func.func @transform_1(%arg0: i32) -> (i32, i32) {
    %c0_i32 = arith.constant 0 : i32
    %c0_i32_0 = arith.constant 0 : i32
    %c0_i32_1 = arith.constant 0 : i32
    return %c0_i32, %c0_i32_0 : i32, i32
  }
  func.func @transform_2(%arg0: i32) -> (i32, i32) {
    %c0_i32 = arith.constant 0 : i32
    %c0_i32_0 = arith.constant 0 : i32
    %c0_i32_1 = arith.constant 0 : i32
    return %c0_i32, %c0_i32_0 : i32, i32
  }
  func.func @transform_3(%arg0: i32) -> (i32, i32) {
    %c0_i32 = arith.constant 0 : i32
    %c0_i32_0 = arith.constant 0 : i32
    %c0_i32_1 = arith.constant 0 : i32
    return %c0_i32, %c0_i32_0 : i32, i32
  }
  func.func @transform_4(%arg0: i32) -> (i32, i32) {
    %c0_i32 = arith.constant 0 : i32
    %c0_i32_0 = arith.constant 0 : i32
    return %c0_i32, %arg0 : i32, i32
  }
}

</mosaic_0001>

<llo_original>
// kernel: tpu_custom_call.1
$region0: #{tpu_custom_call.1}
  #allocation0 [shape = 'u32[]', space=smem, size = 0x4, offset = 0x4, fixed_abs, tag = 'smem constant byte address 0x4 - core index']
  #allocation1 [shape = 'u32[144,128]{1,0:T(1,128)}', space=vmem, size = 0x12000, scoped, tag = 'internal scratch']
  %s0 = inlined_call_operand.vmem [shape: f32[16,16], index: 0, kind: input, shape index: {}]
  %s1 = inlined_call_operand.vmem [shape: f32[96,16], index: 1, kind: input, shape index: {}]
  %s2 = inlined_call_operand.vmem [shape: f32[96,1], index: 2, kind: input, shape index: {}]
  %s3 = inlined_call_operand.vmem [shape: f32[8,32], index: 3, kind: input, shape index: {}]
  %s4 = inlined_call_operand.hbm [shape: f32[8,16], index: 4, kind: output, shape index: {}]
  %s5 = sld [smem:[#allocation0]]
  $region26: #{tpu_custom_call.1} parent=0
    _
  %s7 = ssub.s32 1, %s5
  %s8 = scalar_select 0, %s7, %s5
  $region1: #{tpu_custom_call.1} parent=0
    #allocation2 [shape = 'u8[4096]{0}', space=vmem, size = 0x1000, scoped, tag = 'output window, operand 0, single buffered']
    #allocation3 [shape = 's32[1]{0}', space=sflag, size = 0x4, scoped, tag = 'scoped memory for tpu_custom_call.1']
    %9 = vsyncpa [#allocation3], 0
    // Predicated region
    $region2: #{tpu_custom_call.1} parent=1 // pred_check
      _
    $region3: #{tpu_custom_call.1} parent=1 // pred_check_branch
      %11 = sbr.rel (0) target = $region5
    $region4: #{tpu_custom_call.1} parent=1 // pred_region
      _
    $region5: #{tpu_custom_call.1} parent=1 // pred_fallthru
      _
    // Predicated region
    $region6: #{tpu_custom_call.1} parent=1 // pred_check
      _
    $region7: #{tpu_custom_call.1} parent=1 // pred_check_branch
      %13 = sbr.rel (0) target = $region9
    $region8: #{tpu_custom_call.1} parent=1 // pred_region
      _
    $region9: #{tpu_custom_call.1} parent=1 // pred_fallthru
      _
    // Predicated region
    $region10: #{tpu_custom_call.1} parent=1 // pred_check
      _
    $region11: #{tpu_custom_call.1} parent=1 // pred_check_branch
      %15 = sbr.rel (0) target = $region13
    $region12: #{tpu_custom_call.1} parent=1 // pred_region
      _
    $region13: #{tpu_custom_call.1} parent=1 // pred_fallthru
      _
    // Predicated region
    $region14: #{tpu_custom_call.1} parent=1 // pred_check
      _
    $region15: #{tpu_custom_call.1} parent=1 // pred_check_branch
      %17 = sbr.rel (0) target = $region17
    $region16: #{tpu_custom_call.1} parent=1 // pred_region
      _
    $region17: #{tpu_custom_call.1} parent=1 // pred_fallthru
      _
    %v18 = vld [vmem:[%s0] sm:$0xff]
    %v19 = vld [vmem:[%s0 + $0x8] sm:$0xff]
    %v20 = vld [vmem:[%s1] sm:$0xff]
    %v21 = vld [vmem:[%s1 + $0x8] sm:$0xff]
    %v22 = vld [vmem:[%s1 + $0x10] sm:$0xff]
    %v23 = vld [vmem:[%s1 + $0x18] sm:$0xff]
    %v24 = vld [vmem:[%s1 + $0x20] sm:$0xff]
    %v25 = vld [vmem:[%s1 + $0x28] sm:$0xff]
    %v26 = vld [vmem:[%s1 + $0x30] sm:$0xff]
    %v27 = vld [vmem:[%s1 + $0x38] sm:$0xff]
    %v28 = vld [vmem:[%s1 + $0x40] sm:$0xff]
    %v29 = vld [vmem:[%s1 + $0x48] sm:$0xff]
    %v30 = vld [vmem:[%s1 + $0x50] sm:$0xff]
    %v31 = vld [vmem:[%s1 + $0x58] sm:$0xff]
    %v32 = vld [vmem:[%s2] sm:$0xff]
    %v33 = vld [vmem:[%s2 + $0x8] sm:$0xff]
    %v34 = vld [vmem:[%s2 + $0x10] sm:$0xff]
    %v35 = vld [vmem:[%s2 + $0x18] sm:$0xff]
    %v36 = vld [vmem:[%s2 + $0x20] sm:$0xff]
    %v37 = vld [vmem:[%s2 + $0x28] sm:$0xff]
    %v38 = vld [vmem:[%s2 + $0x30] sm:$0xff]
    %v39 = vld [vmem:[%s2 + $0x38] sm:$0xff]
    %v40 = vld [vmem:[%s2 + $0x40] sm:$0xff]
    %v41 = vld [vmem:[%s2 + $0x48] sm:$0xff]
    %v42 = vld [vmem:[%s2 + $0x50] sm:$0xff]
    %v43 = vld [vmem:[%s2 + $0x58] sm:$0xff]
    %45 = vset.pattern.permute.xlu0 0
    %46 = vperm.xlu0 %45, %v32
    %v47 = vpop.permute.xlu0 %46
    %50 = vset.pattern.permute.xlu0 0
    %51 = vperm.xlu0 %50, %v33
    %v52 = vpop.permute.xlu0 %51
    %55 = vset.pattern.permute.xlu0 0
    %56 = vperm.xlu0 %55, %v34
    %v57 = vpop.permute.xlu0 %56
    %60 = vset.pattern.permute.xlu0 0
    %61 = vperm.xlu0 %60, %v35
    %v62 = vpop.permute.xlu0 %61
    %65 = vset.pattern.permute.xlu0 0
    %66 = vperm.xlu0 %65, %v36
    %v67 = vpop.permute.xlu0 %66
    %70 = vset.pattern.permute.xlu0 0
    %71 = vperm.xlu0 %70, %v37
    %v72 = vpop.permute.xlu0 %71
    %75 = vset.pattern.permute.xlu0 0
    %76 = vperm.xlu0 %75, %v38
    %v77 = vpop.permute.xlu0 %76
    %80 = vset.pattern.permute.xlu0 0
    %81 = vperm.xlu0 %80, %v39
    %v82 = vpop.permute.xlu0 %81
    %85 = vset.pattern.permute.xlu0 0
    %86 = vperm.xlu0 %85, %v40
    %v87 = vpop.permute.xlu0 %86
    %90 = vset.pattern.permute.xlu0 0
    %91 = vperm.xlu0 %90, %v41
    %v92 = vpop.permute.xlu0 %91
    %95 = vset.pattern.permute.xlu0 0
    %96 = vperm.xlu0 %95, %v42
    %v97 = vpop.permute.xlu0 %96
    %100 = vset.pattern.permute.xlu0 0
    %101 = vperm.xlu0 %100, %v43
    %v102 = vpop.permute.xlu0 %101
    %vm104 = vcmask 130048
    %v106 = vsel %vm104, %v20, 0
    %v109 = vsel %vm104, %v21, 0
    %v112 = vsel %vm104, %v22, 0
    %v115 = vsel %vm104, %v23, 0
    %v118 = vsel %vm104, %v24, 0
    %v121 = vsel %vm104, %v25, 0
    %v124 = vsel %vm104, %v26, 0
    %v127 = vsel %vm104, %v27, 0
    %v130 = vsel %vm104, %v28, 0
    %v133 = vsel %vm104, %v29, 0
    %v136 = vsel %vm104, %v30, 0
    %v139 = vsel %vm104, %v31, 0
    %v142 = vsel %vm104, %v18, 0
    %v145 = vsel %vm104, %v19, 0
    %147 = vmatprep.subr.mxu0 0.0
    %148 = vmatpush1.xpose.msra.mxu0 %v142
    %149 = vmatprep.subr.mxu0 0.0
    %150 = vmatpush1.xpose.msra.mxu0 %v145
    %151 = vmatprep.subr.mxu0 0.0
    %152 = vmatpush1.xpose.msra.mxu0 0.0
    %153 = vmatprep.subr.mxu0 0.0
    %154 = vmatpush1.xpose.msra.mxu0 0.0
    %155 = vmatprep.subr.mxu0 0.0
    %156 = vmatpush1.xpose.msra.mxu0 0.0
    %157 = vmatprep.subr.mxu0 0.0
    %158 = vmatpush1.xpose.msra.mxu0 0.0
    %159 = vmatprep.subr.mxu0 0.0
    %160 = vmatpush1.xpose.msra.mxu0 0.0
    %161 = vmatprep.subr.mxu0 0.0
    %162 = vmatpush1.xpose.msra.mxu0 0.0
    %163 = vmatprep.subr.mxu0 0.0
    %164 = vmatpush1.xpose.msra.mxu0 0.0
    %165 = vmatprep.subr.mxu0 0.0
    %166 = vmatpush1.xpose.msra.mxu0 0.0
    %167 = vmatprep.subr.mxu0 0.0
    %168 = vmatpush1.xpose.msra.mxu0 0.0
    %169 = vmatprep.subr.mxu0 0.0
    %170 = vmatpush1.xpose.msra.mxu0 0.0
    %171 = vmatprep.subr.mxu0 0.0
    %172 = vmatpush1.xpose.msra.mxu0 0.0
    %173 = vmatprep.subr.mxu0 0.0
    %174 = vmatpush1.xpose.msra.mxu0 0.0
    %175 = vmatprep.subr.mxu0 0.0
    %176 = vmatpush1.xpose.msra.mxu0 0.0
    %177 = vmatprep.subr.mxu0 0.0
    %178 = vmatpush1.xpose.msra.mxu0 0.0
    %179 = vmatprep.subr.mxu0 0.0
    %180 = vmatpush1.xpose.msra.mxu0 0.0
    %181 = vmatprep.subr.mxu0 0.0
    %182 = vmatpush1.xpose.msra.mxu0 0.0
    %183 = vmatprep.subr.mxu0 0.0
    %184 = vmatpush1.xpose.msra.mxu0 0.0
    %185 = vmatprep.subr.mxu0 0.0
    %186 = vmatpush1.xpose.msra.mxu0 0.0
    %187 = vmatprep.subr.mxu0 0.0
    %188 = vmatpush1.xpose.msra.mxu0 0.0
    %189 = vmatprep.subr.mxu0 0.0
    %190 = vmatpush1.xpose.msra.mxu0 0.0
    %191 = vmatprep.subr.mxu0 0.0
    %192 = vmatpush1.xpose.msra.mxu0 0.0
    %193 = vmatprep.subr.mxu0 0.0
    %194 = vmatpush1.xpose.msra.mxu0 0.0
    %195 = vmatprep.subr.mxu0 0.0
    %196 = vmatpush1.xpose.msra.mxu0 0.0
    %197 = vmatprep.subr.mxu0 0.0
    %198 = vmatpush1.xpose.msra.mxu0 0.0
    %199 = vmatprep.subr.mxu0 0.0
    %200 = vmatpush1.xpose.msra.mxu0 0.0
    %201 = vmatprep.subr.mxu0 0.0
    %202 = vmatpush1.xpose.msra.mxu0 0.0
    %203 = vmatprep.subr.mxu0 0.0
    %204 = vmatpush1.xpose.msra.mxu0 0.0
    %205 = vmatprep.subr.mxu0 0.0
    %206 = vmatpush1.xpose.msra.mxu0 0.0
    %207 = vmatprep.subr.mxu0 0.0
    %208 = vmatpush1.xpose.msra.mxu0 0.0
    %209 = vmatprep.subr.mxu0 0.0
    %210 = vmatpush1.xpose.msra.mxu0 0.0
    %211 = vmatprep.mubr.f32.mxu0 0.0
    %212 = vmatmul.mubr.f32.gmra.mrb[0].mxu0 %v106
    %v213 = vpop.f32.mrb[0].mxu0
    %v214 = vadd.f32 %v47, %v213
    %v215 = vpop.f32.mrb[0].mxu0
    %216 = vmatprep.mubr.f32.mxu0 0.0
    %217 = vmatmul.mubr.f32.gmra.mrb[0].mxu0 %v109
    %v218 = vpop.f32.mrb[0].mxu0
    %v219 = vadd.f32 %v52, %v218
    %v220 = vpop.f32.mrb[0].mxu0
    %221 = vmatprep.mubr.f32.mxu0 0.0
    %222 = vmatmul.mubr.f32.gmra.mrb[0].mxu0 %v112
    %v223 = vpop.f32.mrb[0].mxu0
    %v224 = vadd.f32 %v57, %v223
    %v225 = vpop.f32.mrb[0].mxu0
    %226 = vmatprep.mubr.f32.mxu0 0.0
    %227 = vmatmul.mubr.f32.gmra.mrb[0].mxu0 %v115
    %v228 = vpop.f32.mrb[0].mxu0
    %v229 = vadd.f32 %v62, %v228
    %v230 = vpop.f32.mrb[0].mxu0
    %231 = vmatprep.mubr.f32.mxu0 0.0
    %232 = vmatmul.mubr.f32.gmra.mrb[0].mxu0 %v118
    %v233 = vpop.f32.mrb[0].mxu0
    %v234 = vadd.f32 %v67, %v233
    %v235 = vpop.f32.mrb[0].mxu0
    %236 = vmatprep.mubr.f32.mxu0 0.0
    %237 = vmatmul.mubr.f32.gmra.mrb[0].mxu0 %v121
    %v238 = vpop.f32.mrb[0].mxu0
    %v239 = vadd.f32 %v72, %v238
    %v240 = vpop.f32.mrb[0].mxu0
    %241 = vmatprep.mubr.f32.mxu0 0.0
    %242 = vmatmul.mubr.f32.gmra.mrb[0].mxu0 %v124
    %v243 = vpop.f32.mrb[0].mxu0
    %v244 = vadd.f32 %v77, %v243
    %v245 = vpop.f32.mrb[0].mxu0
    %246 = vmatprep.mubr.f32.mxu0 0.0
    %247 = vmatmul.mubr.f32.gmra.mrb[0].mxu0 %v127
    %v248 = vpop.f32.mrb[0].mxu0
    %v249 = vadd.f32 %v82, %v248
    %v250 = vpop.f32.mrb[0].mxu0
    %251 = vmatprep.mubr.f32.mxu0 0.0
    %252 = vmatmul.mubr.f32.gmra.mrb[0].mxu0 %v130
    %v253 = vpop.f32.mrb[0].mxu0
    %v254 = vadd.f32 %v87, %v253
    %v255 = vpop.f32.mrb[0].mxu0
    %256 = vmatprep.mubr.f32.mxu0 0.0
    %257 = vmatmul.mubr.f32.gmra.mrb[0].mxu0 %v133
    %v258 = vpop.f32.mrb[0].mxu0
    %v259 = vadd.f32 %v92, %v258
    %v260 = vpop.f32.mrb[0].mxu0
    %261 = vmatprep.mubr.f32.mxu0 0.0
    %262 = vmatmul.mubr.f32.gmra.mrb[0].mxu0 %v136
    %v263 = vpop.f32.mrb[0].mxu0
    %v264 = vadd.f32 %v97, %v263
    %v265 = vpop.f32.mrb[0].mxu0
    %266 = vmatprep.mubr.f32.mxu0 0.0
    %267 = vmatmul.mubr.f32.gmra.mrb[0].mxu0 %v139
    %v268 = vpop.f32.mrb[0].mxu0
    %v269 = vadd.f32 %v102, %v268
    %v270 = vpop.f32.mrb[0].mxu0
    %271 = vdwg.mxu0
    %v272 = vmul.f32 %v214, %v234
    %v273 = vmul.f32 %v219, %v239
    %v274 = vmul.f32 %v224, %v244
    %v275 = vmul.f32 %v229, %v249
    %v276 = vmul.f32 %v272, %v254
    %v277 = vmul.f32 %v273, %v259
    %v278 = vmul.f32 %v274, %v264
    %v279 = vmul.f32 %v275, %v269
    %v280 = vld [vmem:[%s3] sm:$0xff]
    %vm281 = vcmask 261120
    %v283 = vsel %vm281, %v280, 0
    %285 = vmatprep.subr.mxu0 0.0
    %286 = vmatpush1.msra.mxu0 %v276
    %287 = vmatprep.subr.mxu0 0.0
    %288 = vmatpush1.msra.mxu0 %v277
    %289 = vmatprep.subr.mxu0 0.0
    %290 = vmatpush1.msra.mxu0 %v278
    %291 = vmatprep.subr.mxu0 0.0
    %292 = vmatpush1.msra.mxu0 %v279
    %293 = vmatprep.subr.mxu0 0.0
    %294 = vmatpush1.msra.mxu0 0.0
    %295 = vmatprep.subr.mxu0 0.0
    %296 = vmatpush1.msra.mxu0 0.0
    %297 = vmatprep.subr.mxu0 0.0
    %298 = vmatpush1.msra.mxu0 0.0
    %299 = vmatprep.subr.mxu0 0.0
    %300 = vmatpush1.msra.mxu0 0.0
    %301 = vmatprep.subr.mxu0 0.0
    %302 = vmatpush1.msra.mxu0 0.0
    %303 = vmatprep.subr.mxu0 0.0
    %304 = vmatpush1.msra.mxu0 0.0
    %305 = vmatprep.subr.mxu0 0.0
    %306 = vmatpush1.msra.mxu0 0.0
    %307 = vmatprep.subr.mxu0 0.0
    %308 = vmatpush1.msra.mxu0 0.0
    %309 = vmatprep.subr.mxu0 0.0
    %310 = vmatpush1.msra.mxu0 0.0
    %311 = vmatprep.subr.mxu0 0.0
    %312 = vmatpush1.msra.mxu0 0.0
    %313 = vmatprep.subr.mxu0 0.0
    %314 = vmatpush1.msra.mxu0 0.0
    %315 = vmatprep.subr.mxu0 0.0
    %316 = vmatpush1.msra.mxu0 0.0
    %317 = vmatprep.subr.mxu0 0.0
    %318 = vmatpush1.msra.mxu0 0.0
    %319 = vmatprep.subr.mxu0 0.0
    %320 = vmatpush1.msra.mxu0 0.0
    %321 = vmatprep.subr.mxu0 0.0
    %322 = vmatpush1.msra.mxu0 0.0
    %323 = vmatprep.subr.mxu0 0.0
    %324 = vmatpush1.msra.mxu0 0.0
    %325 = vmatprep.subr.mxu0 0.0
    %326 = vmatpush1.msra.mxu0 0.0
    %327 = vmatprep.subr.mxu0 0.0
    %328 = vmatpush1.msra.mxu0 0.0
    %329 = vmatprep.subr.mxu0 0.0
    %330 = vmatpush1.msra.mxu0 0.0
    %331 = vmatprep.subr.mxu0 0.0
    %332 = vmatpush1.msra.mxu0 0.0
    %333 = vmatprep.subr.mxu0 0.0
    %334 = vmatpush1.msra.mxu0 0.0
    %335 = vmatprep.subr.mxu0 0.0
    %336 = vmatpush1.msra.mxu0 0.0
    %337 = vmatprep.subr.mxu0 0.0
    %338 = vmatpush1.msra.mxu0 0.0
    %339 = vmatprep.subr.mxu0 0.0
    %340 = vmatpush1.msra.mxu0 0.0
    %341 = vmatprep.subr.mxu0 0.0
    %342 = vmatpush1.msra.mxu0 0.0
    %343 = vmatprep.subr.mxu0 0.0
    %344 = vmatpush1.msra.mxu0 0.0
    %345 = vmatprep.subr.mxu0 0.0
    %346 = vmatpush1.msra.mxu0 0.0
    %347 = vmatprep.subr.mxu0 0.0
    %348 = vmatpush1.msra.mxu0 0.0
    %349 = vmatprep.mubr.f32.mxu0 0.0
    %350 = vmatmul.mubr.f32.gmra.mrb[0].mxu0 %v283
    %v351 = vpop.f32.mrb[0].mxu0
    %v352 = vadd.f32 0.0, %v351
    %v353 = vpop.f32.mrb[0].mxu0
    %354 = vdwg.mxu0
    %355 = vst.msk [vmem:[#allocation2] sm:$0xff] %vm104, %v352
    // Predicated region
    $region18: #{tpu_custom_call.1} parent=1 // pred_check
      _
    $region19: #{tpu_custom_call.1} parent=1 // pred_check_branch
      %357 = sbr.rel (0) target = $region21
    $region20: #{tpu_custom_call.1} parent=1 // pred_region
      %s359 = ssub.s32 128, 128
      %360 = vsyncadd [#allocation3], %s359
      %s362 = sshll.u32 [#allocation2], 4
      %s363 = int_to_ptr.vmem [resolvable:$true] %s362
      %365 = dma.vmem_to_hbm [thread:$0]  %s363, 128, %s4, [#allocation3]
    $region21: #{tpu_custom_call.1} parent=1 // pred_fallthru
      _
    // Predicated region
    $region22: #{tpu_custom_call.1} parent=1 // pred_check
      _
    $region23: #{tpu_custom_call.1} parent=1 // pred_check_branch
      %367 = sbr.rel (0) target = $region25
    $region24: #{tpu_custom_call.1} parent=1 // pred_region
      %368 = dma.done [#allocation3], 128
    $region25: #{tpu_custom_call.1} parent=1 // pred_fallthru
      _
    %369 = vsyncpa [#allocation3], 1

</llo_original>
